<compile_context>
chip_gen: v7x
topology: tpu7x:2x2x1
jax: 0.10.0
libtpu: 0.0.40
codegen_flags: <defaults>
</compile_context>

<pallas_src>
import functools

import jax
import jax.numpy as jnp
from jax.experimental import pallas as pl
from jax.experimental.pallas import tpu as pltpu

SMOOTHING = 0.2  # forward() default argument in the PyTorch module

_VMEM_WORKSET_BUDGET = 32 * 1024 * 1024   # target per-step working set
_VMEM_LIMIT_BYTES = 48 * 1024 * 1024      # scoped VMEM limit (safe v5e/v6e/v7x)
_MAX_TN = 4096                            # diminishing returns past this


def _choose_tile_n(n, c, itemsize):
    """Row-tile size: multiple of 8, dtype-aware, sized from the VMEM budget."""
    # 2x input block (double buffered, input dtype) + ~4x f32 block temporaries
    bytes_per_row = 2 * c * itemsize + 4 * c * 4
    tn = _VMEM_WORKSET_BUDGET // bytes_per_row
    tn = max(8, min(tn, _MAX_TN))
    tn = (tn // 8) * 8

    n_up = ((n + 7) // 8) * 8
    if tn >= n_up:
        if n_up <= 8:
            tn = 8
        else:
            # keep >= 2 grid steps so the parallel axis can split across
            # both v7x TensorCores (harmless ~0.35us extra step elsewhere)
            tn = ((n_up // 2 + 7) // 8) * 8
    return max(8, tn)


def _make_kernel(n_actual, tn, c, smoothing, needs_mask):
    keep = 1.0 - smoothing
    smooth_over_c = smoothing / c

    def kernel(pred_ref, label_ref, out_ref):
        x = pred_ref[...].astype(jnp.float32)            # (tn, c) f32 in-register
        lbl = label_ref[...]                             # (tn, 1) int32

        # stable log-sum-exp pieces
        m = jnp.max(x, axis=1, keepdims=True)            # (tn, 1)
        z = x - m                                        # (tn, c)
        lse = jnp.log(jnp.sum(jnp.exp(z), axis=1, keepdims=True))  # (tn, 1)

        # fused label-smoothing weights: w = s/C + (1-s)*onehot, sum(w) = 1
        # (1, c) iota broadcasts against (tn, 1) labels -> no (tn, c) int temp
        cls = jax.lax.broadcasted_iota(jnp.int32, (1, c), 1)
        w = jnp.where(cls == lbl, keep + smooth_over_c, smooth_over_c)  # (tn, c)
        wz = jnp.sum(w * z, axis=1, keepdims=True)       # (tn, 1)

        # per_row = rowmax + lse - sum(w*x)  ==  lse - sum(w*z)
        per_row = lse - wz                               # (tn, 1)

        if needs_mask:
            # Last block is partial: OOB rows hold stale VMEM (possibly NaN).
            # Elementwise select zeroes them before the tile reduction.
            row = pl.program_id(0) * tn + jax.lax.broadcasted_iota(
                jnp.int32, (tn, 1), 0)
            per_row = jnp.where(row < n_actual, per_row, 0.0)

        partial = jnp.sum(per_row)                       # scalar tile partial

        # Full (8,128) lane-dense block: partial at [0,0], zeros elsewhere,
        # so the wrapper epilogue is a plain global sum (no strided gather).
        sub = jax.lax.broadcasted_iota(jnp.int32, (8, 128), 0)
        lane = jax.lax.broadcasted_iota(jnp.int32, (8, 128), 1)
        out_ref[...] = jnp.where((sub == 0) & (lane == 0), partial, 0.0)

    return kernel


@functools.partial(jax.jit, static_argnames=("smoothing",))
def label_smooth_ce_loss(pred, label, smoothing=SMOOTHING):
    """pred: (N, C) float logits (f32 or bf16); label: (N,) int classes -> scalar."""
    n, c = pred.shape
    itemsize = jnp.dtype(pred.dtype).itemsize
    tn = _choose_tile_n(n, c, itemsize)
    num_tiles = pl.cdiv(n, tn)
    needs_mask = (n % tn) != 0

    label2d = label.astype(jnp.int32).reshape(n, 1)
    kernel = _make_kernel(n, tn, c, float(smoothing), needs_mask)

    cost = pl.CostEstimate(
        flops=6 * n * c,
        transcendentals=n * c,
        bytes_accessed=n * c * itemsize + n * 4 + num_tiles * 8 * 128 * 4,
    )

    partials = pl.pallas_call(
        kernel,
        out_shape=jax.ShapeDtypeStruct((num_tiles * 8, 128), jnp.float32),
        grid=(num_tiles,),
        in_specs=[
            pl.BlockSpec((tn, c), lambda i: (i, 0)),   # logits row-tile (no pad)
            pl.BlockSpec((tn, 1), lambda i: (i, 0)),   # labels row-tile
        ],
        out_specs=pl.BlockSpec((8, 128), lambda i: (i, 0)),
        compiler_params=pltpu.CompilerParams(
            dimension_semantics=("parallel",),          # megacore-shardable (v7x)
            vmem_limit_bytes=_VMEM_LIMIT_BYTES,
        ),
        cost_estimate=cost,
    )(pred, label2d)

    # Only [0,0] of each tile block is non-zero -> plain sum is exact.
    return jnp.sum(partials) / n


if __name__ == "__main__":
    key = jax.random.PRNGKey(0)

    def reference(pred, label, s=SMOOTHING):
        p = jax.nn.softmax(pred.astype(jnp.float32), axis=1)
        oh = jax.nn.one_hot(label, pred.shape[1], dtype=jnp.float32)
        soh = (1.0 - s) * oh + s / pred.shape[1]
        return jnp.mean(jnp.sum(-jnp.log(p) * soh, axis=1))

    # case 1: small shape, single full tile (N == 8)
    k1, k2, k3, k4 = jax.random.split(key, 4)
    N1, C1 = 8, 32
    pred1 = jax.random.normal(k1, (N1, C1), dtype=jnp.float32)
    label1 = jax.random.randint(k2, (N1,), 0, C1, dtype=jnp.int32)
    loss1 = label_smooth_ce_loss(pred1, label1)
    jax.block_until_ready(loss1)
    assert jnp.allclose(loss1, reference(pred1, label1), rtol=1e-5, atol=1e-5), (
        loss1, reference(pred1, label1))

    # case 2: two tiles, last block partial (no wrapper-side padding)
    N2, C2 = 20, 160
    pred2 = jax.random.normal(k3, (N2, C2), dtype=jnp.float32)
    label2 = jax.random.randint(k4, (N2,), 0, C2, dtype=jnp.int32)
    loss2 = label_smooth_ce_loss(pred2, label2)
    jax.block_until_ready(loss2)
    assert jnp.allclose(loss2, reference(pred2, label2), rtol=1e-5, atol=1e-5), (
        loss2, reference(pred2, label2))

    print("KERNEL_OK")
</pallas_src>

<mosaic_0001>
module attributes {stable_mosaic.version = 11 : i64} {
  func.func @kernel(%arg0: i32, %arg1: memref<8x32xf32, #tpu.memory_space<vmem>>, %arg2: memref<8x1xi32, #tpu.memory_space<vmem>>, %arg3: memref<8x128xf32, #tpu.memory_space<vmem>>) attributes {dimension_semantics = [#tpu.dimension_semantics<parallel>], iteration_bounds = array<i64: 1>, scalar_prefetch = 0 : i64, scratch_operands = 0 : i64, tpu.core_type = #tpu.core_type<tc>, window_params = [{transform_indices = @transform_0, window_bounds = array<i64: 8, 32>}, {transform_indices = @transform_1, window_bounds = array<i64: 8, 1>}, {transform_indices = @transform_2, window_bounds = array<i64: 8, 128>}]} {
    %c0 = arith.constant 0 : index
    %c0_0 = arith.constant 0 : index
    %0 = vector.load %arg1[%c0, %c0_0] : memref<8x32xf32, #tpu.memory_space<vmem>>, vector<8x32xf32>
    %c0_1 = arith.constant 0 : index
    %c0_2 = arith.constant 0 : index
    %1 = vector.load %arg2[%c0_1, %c0_2] : memref<8x1xi32, #tpu.memory_space<vmem>>, vector<8x1xi32>
    %cst = arith.constant dense<0xFF800000> : vector<8xf32>
    %2 = vector.multi_reduction <maximumf>, %0, %cst [1] : vector<8x32xf32> to vector<8xf32>
    %3 = vector.shape_cast %2 : vector<8xf32> to vector<8x1xf32>
    %4 = vector.broadcast %3 : vector<8x1xf32> to vector<8x32xf32>
    %5 = arith.subf %0, %4 : vector<8x32xf32>
    %6 = math.exp %5 : vector<8x32xf32>
    %cst_3 = arith.constant dense<0.000000e+00> : vector<8xf32>
    %7 = vector.multi_reduction <add>, %6, %cst_3 [1] : vector<8x32xf32> to vector<8xf32>
    %8 = vector.shape_cast %7 : vector<8xf32> to vector<8x1xf32>
    %9 = math.log %8 : vector<8x1xf32>
    %10 = tpu.iota {dimensions = array<i32: 1>} : vector<1x32xi32>
    %11 = vector.broadcast %10 : vector<1x32xi32> to vector<8x32xi32>
    %12 = vector.broadcast %1 : vector<8x1xi32> to vector<8x32xi32>
    %13 = arith.cmpi eq, %11, %12 : vector<8x32xi32>
    %cst_4 = arith.constant 0.806249976 : f32
    %cst_5 = arith.constant 6.250000e-03 : f32
    %14 = vector.broadcast %cst_4 : f32 to vector<8x32xf32>
    %15 = vector.broadcast %cst_5 : f32 to vector<8x32xf32>
    %16 = arith.select %13, %14, %15 : vector<8x32xi1>, vector<8x32xf32>
    %17 = arith.mulf %16, %5 : vector<8x32xf32>
    %cst_6 = arith.constant dense<0.000000e+00> : vector<8xf32>
    %18 = vector.multi_reduction <add>, %17, %cst_6 [1] : vector<8x32xf32> to vector<8xf32>
    %19 = vector.shape_cast %18 : vector<8xf32> to vector<8x1xf32>
    %20 = arith.subf %9, %19 : vector<8x1xf32>
    %21 = vector.shape_cast %20 : vector<8x1xf32> to vector<1x8x1xf32>
    %cst_7 = arith.constant dense<0.000000e+00> : vector<1xf32>
    %22 = vector.multi_reduction <add>, %21, %cst_7 [1, 2] : vector<1x8x1xf32> to vector<1xf32>
    %23 = vector.shape_cast %22 : vector<1xf32> to vector<1x1x1xf32>
    %24 = vector.extract %23[0, 0, 0] : f32 from vector<1x1x1xf32>
    %25 = tpu.iota {dimensions = array<i32: 0>} : vector<8x128xi32>
    %26 = tpu.iota {dimensions = array<i32: 1>} : vector<8x128xi32>
    %c0_i32 = arith.constant 0 : i32
    %27 = vector.broadcast %c0_i32 : i32 to vector<8x128xi32>
    %28 = arith.cmpi eq, %25, %27 : vector<8x128xi32>
    %c0_i32_8 = arith.constant 0 : i32
    %29 = vector.broadcast %c0_i32_8 : i32 to vector<8x128xi32>
    %30 = arith.cmpi eq, %26, %29 : vector<8x128xi32>
    %31 = arith.andi %28, %30 : vector<8x128xi1>
    %cst_9 = arith.constant 0.000000e+00 : f32
    %32 = vector.broadcast %24 : f32 to vector<8x128xf32>
    %33 = vector.broadcast %cst_9 : f32 to vector<8x128xf32>
    %34 = arith.select %31, %32, %33 : vector<8x128xi1>, vector<8x128xf32>
    %c0_10 = arith.constant 0 : index
    %c0_11 = arith.constant 0 : index
    %35 = vector.load %arg3[%c0_10, %c0_11] : memref<8x128xf32, #tpu.memory_space<vmem>>, vector<8x128xf32>
    tpu.vector_store %arg3[%c0_10, %c0_11], %34 {strides = array<i32>} : memref<8x128xf32, #tpu.memory_space<vmem>>, vector<8x128xf32>,
    return
  }
  func.func @transform_0(%arg0: i32) -> (i32, i32) {
    %c0_i32 = arith.constant 0 : i32
    %c0_i32_0 = arith.constant 0 : i32
    return %arg0, %c0_i32 : i32, i32
  }
  func.func @transform_1(%arg0: i32) -> (i32, i32) {
    %c0_i32 = arith.constant 0 : i32
    %c0_i32_0 = arith.constant 0 : i32
    return %arg0, %c0_i32 : i32, i32
  }
  func.func @transform_2(%arg0: i32) -> (i32, i32) {
    %c0_i32 = arith.constant 0 : i32
    %c0_i32_0 = arith.constant 0 : i32
    return %arg0, %c0_i32 : i32, i32
  }
}

</mosaic_0001>

<llo_original>
// kernel: label_smooth_ce_loss.1
$region0: #{label_smooth_ce_loss.1}
  #allocation0 [shape = 'u32[]', space=smem, size = 0x4, offset = 0x4, fixed_abs, tag = 'smem constant byte address 0x4 - core index']
  #allocation1 [shape = 'u32[144,128]{1,0:T(1,128)}', space=vmem, size = 0x12000, scoped, tag = 'internal scratch']
  %s0 = inlined_call_operand.vmem [shape: f32[8,32], index: 0, kind: input, shape index: {}]
  %s1 = inlined_call_operand.vmem [shape: s32[8,1], index: 1, kind: input, shape index: {}]
  %s2 = inlined_call_operand.vmem [shape: f32[8,128], index: 2, kind: output, shape index: {}]
  %s3 = sld [smem:[#allocation0]]
  $region18: #{label_smooth_ce_loss.1} parent=0
    _
  %s5 = ssub.s32 1, %s3
  %s6 = scalar_select 0, %s5, %s3
  // Predicated region
  $region2: #{label_smooth_ce_loss.1} parent=0 // pred_check
    _
  $region3: #{label_smooth_ce_loss.1} parent=0 // pred_check_branch
    %8 = sbr.rel (0) target = $region5
  $region4: #{label_smooth_ce_loss.1} parent=0 // pred_region
    _
  $region5: #{label_smooth_ce_loss.1} parent=0 // pred_fallthru
    _
  // Predicated region
  $region6: #{label_smooth_ce_loss.1} parent=0 // pred_check
    _
  $region7: #{label_smooth_ce_loss.1} parent=0 // pred_check_branch
    %10 = sbr.rel (0) target = $region9
  $region8: #{label_smooth_ce_loss.1} parent=0 // pred_region
    _
  $region9: #{label_smooth_ce_loss.1} parent=0 // pred_fallthru
    _
  %v11 = vld [vmem:[%s0] sm:$0xff]
  %v12 = vld [vmem:[%s1] sm:$0xff]
  %vm13 = vcmask 261120
  %v14 = vsel %vm13, %v11, -inf
  %15 = vmax.xlane.f32.xlu0 %v14
  %v16 = vpop.xlane.xlu0 %15
  %v17 = vsub.f32 %v11, %v16
  %v18 = vmul.f32 %v17, 1.442695
  %v19 = vpow.pop %v18
  %v20 = vsel %vm13, %v19, 0.0
  %21 = vadd.xlane.f32.xlu0 %v20
  %v22 = vpop.xlane.xlu0 %21
  %v23 = vlog2.pop %v22
  %v24 = vmul.f32 %v23, 0.6931472
  %v25 = vlaneseq
  %v26 = vand.u32 %v25, 127
  %27 = vset.pattern.permute.xlu0 0
  %28 = vperm.xlu0 %27, %v12
  %v29 = vpop.permute.xlu0 %28
  %vm30 = vcmp.eq.s32.totalorder %v26, %v29
  %v31 = vsel %vm30, 0.80625, 0.00625
  %v32 = vmul.f32 %v31, %v17
  %v33 = vsel %vm13, %v32, 0.0
  %34 = vadd.xlane.f32.xlu0 %v33
  %v35 = vpop.xlane.xlu0 %34
  %v36 = vsub.f32 %v24, %v35
  %vm37 = vcmask 7168
  %v38 = vsel %vm37, %v36, 0.0
  %39 = vadd.xlane.f32.xlu0 %v38
  %v40 = vpop.xlane.xlu0 %39
  %v41 = vrot.slane %v40, 4
  %v42 = vadd.f32 %v40, %v41
  %v43 = vrot.slane %v42, 2
  %v44 = vadd.f32 %v42, %v43
  %v45 = vrot.slane %v44, 1
  %v46 = vadd.f32 %v44, %v45
  %s47 = vtos %v46
  %v48 = vlaneseq
  %v49 = vshrl.u32 %v48, 7
  %vm50 = vcmp.eq.s32.totalorder %v49, 0
  %vm51 = vcmp.eq.s32.totalorder %v26, 0
  %vm52 = vmand %vm50, %vm51
  %v53 = vstv %s47
  %v54 = vsel %vm52, %v53, 0.0
  %55 = vst [vmem:[%s2] sm:$0xff] %v54
  // Predicated region
  $region10: #{label_smooth_ce_loss.1} parent=0 // pred_check
    _
  $region11: #{label_smooth_ce_loss.1} parent=0 // pred_check_branch
    %57 = sbr.rel (0) target = $region13
  $region12: #{label_smooth_ce_loss.1} parent=0 // pred_region
    _
  $region13: #{label_smooth_ce_loss.1} parent=0 // pred_fallthru
    _
  // Predicated region
  $region14: #{label_smooth_ce_loss.1} parent=0 // pred_check
    _
  $region15: #{label_smooth_ce_loss.1} parent=0 // pred_check_branch
    %59 = sbr.rel (0) target = $region17
  $region16: #{label_smooth_ce_loss.1} parent=0 // pred_region
    _
  $region17: #{label_smooth_ce_loss.1} parent=0 // pred_fallthru
    _

</llo_original>
